<compile_context>
chip_gen: v7x
topology: tpu7x:2x2x1
jax: 0.10.0
libtpu: 0.0.40
codegen_flags: <defaults>
</compile_context>

<pallas_src>
import functools
import math

import jax
import jax.numpy as jnp
from jax.experimental import pallas as pl
from jax.experimental.pallas import tpu as pltpu


def _arcface_kernel(emb_ref, k_ref, tgt_ref, out_ref, *,
                    cos_m, sin_m, mm, threshold, s, tile_c, classnum,
                    dot_precision):
    j = pl.program_id(1)                   # class-tile index
    col0 = j * tile_c                      # first global class id of this tile

    col = jax.lax.broadcasted_iota(jnp.int32, (1, tile_c), 1)    # (1, TILE_C)

    # --- l2_norm(kernel, axis=0): per-column inverse norm (applied post-matmul)
    k_tile = k_ref[...]                                          # (D, TILE_C)
    k32 = k_tile.astype(jnp.float32)
    inv_norm = jax.lax.rsqrt(jnp.sum(k32 * k32, axis=0, keepdims=True))
    # Ragged last tile: zero the scale of out-of-range columns so whatever sits
    # in the lane padding can never affect kept columns (they are column-
    # independent anyway; their output writes are dropped by Pallas).
    inv_norm = jnp.where(col < classnum - col0, inv_norm, 0.0)

    # --- cos_theta = embeddings @ kernel_norm, clamp(-1, 1) -------------------
    # (emb @ (K * inv)) == (emb @ K) * inv   since inv_norm is per-column.
    cos_theta = jnp.dot(emb_ref[...], k_tile,
                        preferred_element_type=jnp.float32,
                        precision=dot_precision)                 # (TN, TILE_C)
    cos_theta = jnp.clip(cos_theta * inv_norm, -1.0, 1.0)

    # --- additive angular margin ----------------------------------------------
    sin_theta = jnp.sqrt(jnp.maximum(1.0 - cos_theta * cos_theta, 0.0))
    cos_theta_m = cos_theta * cos_m - sin_theta * sin_m
    cos_theta_m = jnp.where(cos_theta - threshold <= 0.0,
                            cos_theta - mm, cos_theta_m)

    # --- substitute the (row, target[row]) entries, then scale by s -----------
    is_target = col == (tgt_ref[...] - col0)       # (TN,1) vs (1,TC) -> (TN,TC)
    out_ref[...] = (jnp.where(is_target, cos_theta_m, cos_theta) * s
                    ).astype(out_ref.dtype)


def arcface_forward(embeddings, target, kernel, *, s=64.0, m=0.5):
    """Equivalent of ArcFace.forward(embbedings, target)."""
    n, d = embeddings.shape
    dk, c = kernel.shape
    assert dk == d

    cos_m = math.cos(m)
    sin_m = math.sin(m)
    mm = sin_m * m
    threshold = math.cos(math.pi - m)

    # Lane-dense class tile: largest of {2048..128} whose double-buffered weight
    # tile fits an ~8 MiB budget (headroom for emb/out buffers within the 32 MiB
    # default scoped VMEM limit, and v7x's 64 MiB physical VMEM).
    c_lanes = pl.cdiv(c, 128) * 128
    w_itemsize = jnp.dtype(kernel.dtype).itemsize
    tile_c = 128
    for t in (2048, 1024, 512, 256, 128):
        if t <= c_lanes and 2 * d * t * w_itemsize <= 8 * 1024 * 1024:
            tile_c = t
            break

    # Batch tile: bounds resident VMEM for large N and matches the 256-wide MXU.
    tile_n = 256 if n > 256 else n

    # f32 inputs: full-precision multi-pass MXU matmul (free under the HBM-bound
    # weight stream); bf16 inputs stream natively with f32 accumulation.
    if embeddings.dtype == jnp.float32 and kernel.dtype == jnp.float32:
        dot_precision = jax.lax.Precision.HIGHEST
    else:
        dot_precision = jax.lax.Precision.DEFAULT

    grid = (pl.cdiv(n, tile_n), pl.cdiv(c, tile_c))

    # TODO(synk): if a v7x trace shows exposed weight-tile DMA at large TILE_C,
    # add pipeline_mode=pl.Buffered(3) to the weight BlockSpec.
    out = pl.pallas_call(
        functools.partial(_arcface_kernel, cos_m=cos_m, sin_m=sin_m, mm=mm,
                          threshold=threshold, s=s, tile_c=tile_c, classnum=c,
                          dot_precision=dot_precision),
        grid_spec=pltpu.PrefetchScalarGridSpec(
            num_scalar_prefetch=0,
            grid=grid,
            in_specs=[
                pl.BlockSpec((tile_n, d), lambda i, j: (i, 0)),     # embeddings
                pl.BlockSpec((d, tile_c), lambda i, j: (0, j)),     # weight tile
                pl.BlockSpec((tile_n, 1), lambda i, j: (i, 0)),     # target ids
            ],
            out_specs=pl.BlockSpec((tile_n, tile_c), lambda i, j: (i, j)),
        ),
        out_shape=jax.ShapeDtypeStruct((n, c), jnp.float32),
        compiler_params=pltpu.CompilerParams(
            dimension_semantics=("parallel", "parallel")),
    )(embeddings, kernel, target.reshape(n, 1).astype(jnp.int32))

    return out


if __name__ == "__main__":
    key = jax.random.PRNGKey(0)
    k_emb, k_w, k_t = jax.random.split(key, 3)

    N = 8        # batch
    D = 32       # embedding_size
    C = 20       # classnum (not a 128-multiple -> exercises the ragged tile path)
    S, M = 64.0, 0.5

    embeddings = jax.random.normal(k_emb, (N, D), dtype=jnp.float32)
    # __init__ draws uniform(-1,1) then column-renorms; any non-degenerate
    # columns work for the forward pass, so plain uniform(-1,1) is used here.
    kernel = jax.random.uniform(k_w, (D, C), minval=-1.0, maxval=1.0,
                                dtype=jnp.float32)
    target = jax.random.randint(k_t, (N,), 0, C, dtype=jnp.int32)

    out = arcface_forward(embeddings, target, kernel, s=S, m=M)
    out = jax.block_until_ready(out)

    # ---- plain-JAX reference (same math as the torch module) ---------------
    cos_m, sin_m = math.cos(M), math.sin(M)
    mm, threshold = sin_m * M, math.cos(math.pi - M)
    kernel_norm = kernel / jnp.linalg.norm(kernel, axis=0, keepdims=True)
    cos_theta = jnp.clip(
        jnp.dot(embeddings, kernel_norm, precision=jax.lax.Precision.HIGHEST),
        -1.0, 1.0)
    sin_theta = jnp.sqrt(1.0 - cos_theta ** 2)
    cos_theta_m = cos_theta * cos_m - sin_theta * sin_m
    cos_theta_m = jnp.where(cos_theta - threshold <= 0.0,
                            cos_theta - mm, cos_theta_m)
    onehot = jax.nn.one_hot(target, C, dtype=jnp.bool_)
    ref = jnp.where(onehot, cos_theta_m, cos_theta) * S

    assert out.shape == (N, C)
    # Semantic bugs (mask / norm / margin / scale) show up as O(1)-O(10)
    # deviations on this +-64-scaled output; rounding differences are far
    # below this tolerance with the HIGHEST-precision matmul.
    assert jnp.allclose(out, ref, atol=1e-1, rtol=1e-3), (
        float(jnp.max(jnp.abs(out - ref))))
    print("KERNEL_OK")
</pallas_src>

<mosaic_0001>
module attributes {stable_mosaic.version = 11 : i64} {
  func.func @_arcface_kernel(%arg0: i32, %arg1: i32, %arg2: memref<8x32xf32, #tpu.memory_space<vmem>>, %arg3: memref<32x128xf32, #tpu.memory_space<vmem>>, %arg4: memref<8x1xi32, #tpu.memory_space<vmem>>, %arg5: memref<8x128xf32, #tpu.memory_space<vmem>>) attributes {dimension_semantics = [#tpu.dimension_semantics<parallel>, #tpu.dimension_semantics<parallel>], iteration_bounds = array<i64: 1, 1>, scalar_prefetch = 0 : i64, scratch_operands = 0 : i64, tpu.core_type = #tpu.core_type<tc>, window_params = [{transform_indices = @transform_0, window_bounds = array<i64: 8, 32>}, {transform_indices = @transform_1, window_bounds = array<i64: 32, 128>}, {transform_indices = @transform_2, window_bounds = array<i64: 8, 1>}, {transform_indices = @transform_3, window_bounds = array<i64: 8, 128>}]} {
    %c128_i32 = arith.constant 128 : i32
    %0 = arith.muli %arg1, %c128_i32 : i32
    %1 = tpu.iota {dimensions = array<i32: 1>} : vector<1x128xi32>
    %c0 = arith.constant 0 : index
    %c0_0 = arith.constant 0 : index
    %2 = vector.load %arg3[%c0, %c0_0] : memref<32x128xf32, #tpu.memory_space<vmem>>, vector<32x128xf32>
    %3 = arith.mulf %2, %2 : vector<32x128xf32>
    %cst = arith.constant dense<0.000000e+00> : vector<128xf32>
    %4 = vector.multi_reduction <add>, %3, %cst [0] : vector<32x128xf32> to vector<128xf32>
    %5 = vector.shape_cast %4 : vector<128xf32> to vector<1x128xf32>
    %6 = math.rsqrt %5 : vector<1x128xf32>
    %c20_i32 = arith.constant 20 : i32
    %7 = arith.subi %c20_i32, %0 : i32
    %8 = vector.broadcast %7 : i32 to vector<1x128xi32>
    %9 = arith.cmpi slt, %1, %8 : vector<1x128xi32>
    %cst_1 = arith.constant 0.000000e+00 : f32
    %10 = vector.broadcast %cst_1 : f32 to vector<1x128xf32>
    %11 = arith.select %9, %6, %10 : vector<1x128xi1>, vector<1x128xf32>
    %c0_2 = arith.constant 0 : index
    %c0_3 = arith.constant 0 : index
    %12 = vector.load %arg2[%c0_2, %c0_3] : memref<8x32xf32, #tpu.memory_space<vmem>>, vector<8x32xf32>
    %cst_4 = arith.constant dense<0.000000e+00> : vector<8x128xf32>
    %13 = tpu.matmul %12, %2, %cst_4 {dimension_numbers = #tpu.dot_dimension_numbers<[1], [0], [0], [1], [0, 0, 1, 1], [], []>, precision = #tpu.contract_precision<fp32>} : vector<8x32xf32>, vector<32x128xf32>, vector<8x128xf32> -> vector<8x128xf32>
    %14 = vector.broadcast %11 : vector<1x128xf32> to vector<8x128xf32>
    %15 = arith.mulf %13, %14 : vector<8x128xf32>
    %cst_5 = arith.constant -1.000000e+00 : f32
    %cst_6 = arith.constant 1.000000e+00 : f32
    %16 = vector.broadcast %cst_5 : f32 to vector<8x128xf32>
    %17 = arith.maximumf %16, %15 : vector<8x128xf32>
    %18 = vector.broadcast %cst_6 : f32 to vector<8x128xf32>
    %19 = arith.minimumf %18, %17 : vector<8x128xf32>
    %20 = arith.mulf %19, %19 : vector<8x128xf32>
    %cst_7 = arith.constant 1.000000e+00 : f32
    %21 = vector.broadcast %cst_7 : f32 to vector<8x128xf32>
    %22 = arith.subf %21, %20 : vector<8x128xf32>
    %cst_8 = arith.constant 0.000000e+00 : f32
    %23 = vector.broadcast %cst_8 : f32 to vector<8x128xf32>
    %24 = arith.maximumf %22, %23 : vector<8x128xf32>
    %25 = math.sqrt %24 : vector<8x128xf32>
    %cst_9 = arith.constant 0.87758255 : f32
    %26 = vector.broadcast %cst_9 : f32 to vector<8x128xf32>
    %27 = arith.mulf %19, %26 : vector<8x128xf32>
    %cst_10 = arith.constant 0.47942555 : f32
    %28 = vector.broadcast %cst_10 : f32 to vector<8x128xf32>
    %29 = arith.mulf %25, %28 : vector<8x128xf32>
    %30 = arith.subf %27, %29 : vector<8x128xf32>
    %cst_11 = arith.constant -0.87758255 : f32
    %31 = vector.broadcast %cst_11 : f32 to vector<8x128xf32>
    %32 = arith.subf %19, %31 : vector<8x128xf32>
    %cst_12 = arith.constant 0.000000e+00 : f32
    %33 = vector.broadcast %cst_12 : f32 to vector<8x128xf32>
    %34 = arith.cmpf ole, %32, %33 : vector<8x128xf32>
    %cst_13 = arith.constant 0.239712775 : f32
    %35 = vector.broadcast %cst_13 : f32 to vector<8x128xf32>
    %36 = arith.subf %19, %35 : vector<8x128xf32>
    %37 = arith.select %34, %36, %30 : vector<8x128xi1>, vector<8x128xf32>
    %c0_14 = arith.constant 0 : index
    %c0_15 = arith.constant 0 : index
    %38 = vector.load %arg4[%c0_14, %c0_15] : memref<8x1xi32, #tpu.memory_space<vmem>>, vector<8x1xi32>
    %39 = vector.broadcast %0 : i32 to vector<8x1xi32>
    %40 = arith.subi %38, %39 : vector<8x1xi32>
    %41 = vector.broadcast %1 : vector<1x128xi32> to vector<8x128xi32>
    %42 = vector.broadcast %40 : vector<8x1xi32> to vector<8x128xi32>
    %43 = arith.cmpi eq, %41, %42 : vector<8x128xi32>
    %44 = arith.select %43, %37, %19 : vector<8x128xi1>, vector<8x128xf32>
    %cst_16 = arith.constant 6.400000e+01 : f32
    %45 = vector.broadcast %cst_16 : f32 to vector<8x128xf32>
    %46 = arith.mulf %44, %45 : vector<8x128xf32>
    %c0_17 = arith.constant 0 : index
    %c0_18 = arith.constant 0 : index
    %47 = vector.load %arg5[%c0_17, %c0_18] : memref<8x128xf32, #tpu.memory_space<vmem>>, vector<8x128xf32>
    tpu.vector_store %arg5[%c0_17, %c0_18], %46 {strides = array<i32>} : memref<8x128xf32, #tpu.memory_space<vmem>>, vector<8x128xf32>,
    return
  }
  func.func @transform_0(%arg0: i32, %arg1: i32) -> (i32, i32) {
    %c0_i32 = arith.constant 0 : i32
    %c0_i32_0 = arith.constant 0 : i32
    return %arg0, %c0_i32 : i32, i32
  }
  func.func @transform_1(%arg0: i32, %arg1: i32) -> (i32, i32) {
    %c0_i32 = arith.constant 0 : i32
    %c0_i32_0 = arith.constant 0 : i32
    return %c0_i32, %arg1 : i32, i32
  }
  func.func @transform_2(%arg0: i32, %arg1: i32) -> (i32, i32) {
    %c0_i32 = arith.constant 0 : i32
    %c0_i32_0 = arith.constant 0 : i32
    return %arg0, %c0_i32 : i32, i32
  }
  func.func @transform_3(%arg0: i32, %arg1: i32) -> (i32, i32) {
    %c0_i32 = arith.constant 0 : i32
    return %arg0, %arg1 : i32, i32
  }
}

</mosaic_0001>

<llo_original>
// kernel: tpu_custom_call.1
$region0: #{tpu_custom_call.1}
  #allocation0 [shape = 'u32[]', space=smem, size = 0x4, offset = 0x4, fixed_abs, tag = 'smem constant byte address 0x4 - core index']
  #allocation1 [shape = 'u32[144,128]{1,0:T(1,128)}', space=vmem, size = 0x12000, scoped, tag = 'internal scratch']
  %s0 = inlined_call_operand.vmem [shape: f32[8,32], index: 0, kind: input, shape index: {}]
  %s1 = inlined_call_operand.vmem [shape: f32[32,20], index: 1, kind: input, shape index: {}]
  %s2 = inlined_call_operand.vmem [shape: s32[8,1], index: 2, kind: input, shape index: {}]
  %s3 = inlined_call_operand.hbm [shape: f32[8,20], index: 3, kind: output, shape index: {}]
  %s4 = sld [smem:[#allocation0]]
  $region22: #{tpu_custom_call.1} parent=0
    _
  %s6 = ssub.s32 1, %s4
  %s7 = scalar_select 0, %s6, %s4
  $region1: #{tpu_custom_call.1} parent=0
    #allocation2 [shape = 'u8[4096]{0}', space=vmem, size = 0x1000, scoped, tag = 'output window, operand 0, single buffered']
    #allocation3 [shape = 's32[1]{0}', space=sflag, size = 0x4, scoped, tag = 'scoped memory for tpu_custom_call.1']
    %8 = vsyncpa [#allocation3], 0
    // Predicated region
    $region2: #{tpu_custom_call.1} parent=1 // pred_check
      _
    $region3: #{tpu_custom_call.1} parent=1 // pred_check_branch
      %10 = sbr.rel (0) target = $region5
    $region4: #{tpu_custom_call.1} parent=1 // pred_region
      _
    $region5: #{tpu_custom_call.1} parent=1 // pred_fallthru
      _
    // Predicated region
    $region6: #{tpu_custom_call.1} parent=1 // pred_check
      _
    $region7: #{tpu_custom_call.1} parent=1 // pred_check_branch
      %12 = sbr.rel (0) target = $region9
    $region8: #{tpu_custom_call.1} parent=1 // pred_region
      _
    $region9: #{tpu_custom_call.1} parent=1 // pred_fallthru
      _
    // Predicated region
    $region10: #{tpu_custom_call.1} parent=1 // pred_check
      _
    $region11: #{tpu_custom_call.1} parent=1 // pred_check_branch
      %14 = sbr.rel (0) target = $region13
    $region12: #{tpu_custom_call.1} parent=1 // pred_region
      _
    $region13: #{tpu_custom_call.1} parent=1 // pred_fallthru
      _
    %s15 = smul.u32 0, 128
    %v16 = vlaneseq
    %v17 = vand.u32 %v16, 127
    %v18 = vld [vmem:[%s1] sm:$0xff]
    %v19 = vld [vmem:[%s1 + $0x8] sm:$0xff]
    %v20 = vld [vmem:[%s1 + $0x10] sm:$0xff]
    %v21 = vld [vmem:[%s1 + $0x18] sm:$0xff]
    %v22 = vmul.f32 %v18, %v18
    %v23 = vmul.f32 %v19, %v19
    %v24 = vmul.f32 %v20, %v20
    %v25 = vmul.f32 %v21, %v21
    %v26 = vadd.f32 %v22, %v23
    %v27 = vadd.f32 %v26, %v24
    %v28 = vadd.f32 %v27, %v25
    %v29 = vrot.slane %v28, 4
    %v30 = vadd.f32 %v28, %v29
    %v31 = vrot.slane %v30, 2
    %v32 = vadd.f32 %v30, %v31
    %v33 = vrot.slane %v32, 1
    %v34 = vadd.f32 %v32, %v33
    %v35 = vrsqrt.pop %v34
    %s36 = ssub.s32 20, %s15
    %v37 = vstv %s36
    %vm38 = vcmp.lt.s32.totalorder %v17, %v37
    %v39 = vsel %vm38, %v35, 0.0
    %v40 = vld [vmem:[%s0] sm:$0xff]
    %vm41 = vcmask 261120
    %v43 = vsel %vm41, %v40, 0
    %45 = vmatprep.subr.mxu0 0.0
    %v46 = vand.u32 %v18, 4294901760
    %47 = vmatpush1.msra.mxu0 %v46
    %48 = vmatprep.subr.mxu0 0.0
    %v49 = vand.u32 %v19, 4294901760
    %50 = vmatpush1.msra.mxu0 %v49
    %51 = vmatprep.subr.mxu0 0.0
    %v52 = vand.u32 %v20, 4294901760
    %53 = vmatpush1.msra.mxu0 %v52
    %54 = vmatprep.subr.mxu0 0.0
    %v55 = vand.u32 %v21, 4294901760
    %56 = vmatpush1.msra.mxu0 %v55
    %57 = vmatprep.subr.mxu0 0.0
    %58 = vmatpush1.msra.mxu0 0.0
    %59 = vmatprep.subr.mxu0 0.0
    %60 = vmatpush1.msra.mxu0 0.0
    %61 = vmatprep.subr.mxu0 0.0
    %62 = vmatpush1.msra.mxu0 0.0
    %63 = vmatprep.subr.mxu0 0.0
    %64 = vmatpush1.msra.mxu0 0.0
    %65 = vmatprep.subr.mxu0 0.0
    %66 = vmatpush1.msra.mxu0 0.0
    %67 = vmatprep.subr.mxu0 0.0
    %68 = vmatpush1.msra.mxu0 0.0
    %69 = vmatprep.subr.mxu0 0.0
    %70 = vmatpush1.msra.mxu0 0.0
    %71 = vmatprep.subr.mxu0 0.0
    %72 = vmatpush1.msra.mxu0 0.0
    %73 = vmatprep.subr.mxu0 0.0
    %74 = vmatpush1.msra.mxu0 0.0
    %75 = vmatprep.subr.mxu0 0.0
    %76 = vmatpush1.msra.mxu0 0.0
    %77 = vmatprep.subr.mxu0 0.0
    %78 = vmatpush1.msra.mxu0 0.0
    %79 = vmatprep.subr.mxu0 0.0
    %80 = vmatpush1.msra.mxu0 0.0
    %81 = vmatprep.subr.mxu0 0.0
    %82 = vmatpush1.msra.mxu0 0.0
    %83 = vmatprep.subr.mxu0 0.0
    %84 = vmatpush1.msra.mxu0 0.0
    %85 = vmatprep.subr.mxu0 0.0
    %86 = vmatpush1.msra.mxu0 0.0
    %87 = vmatprep.subr.mxu0 0.0
    %88 = vmatpush1.msra.mxu0 0.0
    %89 = vmatprep.subr.mxu0 0.0
    %90 = vmatpush1.msra.mxu0 0.0
    %91 = vmatprep.subr.mxu0 0.0
    %92 = vmatpush1.msra.mxu0 0.0
    %93 = vmatprep.subr.mxu0 0.0
    %94 = vmatpush1.msra.mxu0 0.0
    %95 = vmatprep.subr.mxu0 0.0
    %96 = vmatpush1.msra.mxu0 0.0
    %97 = vmatprep.subr.mxu0 0.0
    %98 = vmatpush1.msra.mxu0 0.0
    %99 = vmatprep.subr.mxu0 0.0
    %100 = vmatpush1.msra.mxu0 0.0
    %101 = vmatprep.subr.mxu0 0.0
    %102 = vmatpush1.msra.mxu0 0.0
    %103 = vmatprep.subr.mxu0 0.0
    %104 = vmatpush1.msra.mxu0 0.0
    %105 = vmatprep.subr.mxu0 0.0
    %106 = vmatpush1.msra.mxu0 0.0
    %107 = vmatprep.subr.mxu0 0.0
    %108 = vmatpush1.msra.mxu0 0.0
    %109 = vmatprep.subr.mxu0 0.0
    %110 = vmatpush1.msra.mxu0 0.0
    %111 = vmatprep.subr.mxu0 0.0
    %112 = vmatpush1.msra.mxu0 0.0
    %113 = vmatprep.mubr.f32.mxu0 0.0
    %v114 = vand.u32 %v43, 4294901760
    %v115 = vsub.f32 %v43, %v114
    %v116 = vand.u32 %v115, 4294901760
    %v117 = vsub.f32 %v115, %v116
    %v118 = vand.u32 %v117, 4294901760
    %119 = vmatmul.mubr.f32.gmra.mrb[0].mxu0 %v118
    %v120 = vpop.f32.mrb[0].mxu0
    %v121 = vadd.f32 0.0, %v120
    %v122 = vpop.f32.mrb[0].mxu0
    %123 = vdwg.mxu0
    %124 = vmatprep.subr.mxu0 0.0
    %v125 = vand.u32 %v18, 4294901760
    %v126 = vsub.f32 %v18, %v125
    %v127 = vand.u32 %v126, 4294901760
    %v128 = vsub.f32 %v126, %v127
    %v129 = vand.u32 %v128, 4294901760
    %130 = vmatpush1.msra.mxu0 %v129
    %131 = vmatprep.subr.mxu0 0.0
    %v132 = vand.u32 %v19, 4294901760
    %v133 = vsub.f32 %v19, %v132
    %v134 = vand.u32 %v133, 4294901760
    %v135 = vsub.f32 %v133, %v134
    %v136 = vand.u32 %v135, 4294901760
    %137 = vmatpush1.msra.mxu0 %v136
    %138 = vmatprep.subr.mxu0 0.0
    %v139 = vand.u32 %v20, 4294901760
    %v140 = vsub.f32 %v20, %v139
    %v141 = vand.u32 %v140, 4294901760
    %v142 = vsub.f32 %v140, %v141
    %v143 = vand.u32 %v142, 4294901760
    %144 = vmatpush1.msra.mxu0 %v143
    %145 = vmatprep.subr.mxu0 0.0
    %v146 = vand.u32 %v21, 4294901760
    %v147 = vsub.f32 %v21, %v146
    %v148 = vand.u32 %v147, 4294901760
    %v149 = vsub.f32 %v147, %v148
    %v150 = vand.u32 %v149, 4294901760
    %151 = vmatpush1.msra.mxu0 %v150
    %152 = vmatprep.subr.mxu0 0.0
    %153 = vmatpush1.msra.mxu0 0.0
    %154 = vmatprep.subr.mxu0 0.0
    %155 = vmatpush1.msra.mxu0 0.0
    %156 = vmatprep.subr.mxu0 0.0
    %157 = vmatpush1.msra.mxu0 0.0
    %158 = vmatprep.subr.mxu0 0.0
    %159 = vmatpush1.msra.mxu0 0.0
    %160 = vmatprep.subr.mxu0 0.0
    %161 = vmatpush1.msra.mxu0 0.0
    %162 = vmatprep.subr.mxu0 0.0
    %163 = vmatpush1.msra.mxu0 0.0
    %164 = vmatprep.subr.mxu0 0.0
    %165 = vmatpush1.msra.mxu0 0.0
    %166 = vmatprep.subr.mxu0 0.0
    %167 = vmatpush1.msra.mxu0 0.0
    %168 = vmatprep.subr.mxu0 0.0
    %169 = vmatpush1.msra.mxu0 0.0
    %170 = vmatprep.subr.mxu0 0.0
    %171 = vmatpush1.msra.mxu0 0.0
    %172 = vmatprep.subr.mxu0 0.0
    %173 = vmatpush1.msra.mxu0 0.0
    %174 = vmatprep.subr.mxu0 0.0
    %175 = vmatpush1.msra.mxu0 0.0
    %176 = vmatprep.subr.mxu0 0.0
    %177 = vmatpush1.msra.mxu0 0.0
    %178 = vmatprep.subr.mxu0 0.0
    %179 = vmatpush1.msra.mxu0 0.0
    %180 = vmatprep.subr.mxu0 0.0
    %181 = vmatpush1.msra.mxu0 0.0
    %182 = vmatprep.subr.mxu0 0.0
    %183 = vmatpush1.msra.mxu0 0.0
    %184 = vmatprep.subr.mxu0 0.0
    %185 = vmatpush1.msra.mxu0 0.0
    %186 = vmatprep.subr.mxu0 0.0
    %187 = vmatpush1.msra.mxu0 0.0
    %188 = vmatprep.subr.mxu0 0.0
    %189 = vmatpush1.msra.mxu0 0.0
    %190 = vmatprep.subr.mxu0 0.0
    %191 = vmatpush1.msra.mxu0 0.0
    %192 = vmatprep.subr.mxu0 0.0
    %193 = vmatpush1.msra.mxu0 0.0
    %194 = vmatprep.subr.mxu0 0.0
    %195 = vmatpush1.msra.mxu0 0.0
    %196 = vmatprep.subr.mxu0 0.0
    %197 = vmatpush1.msra.mxu0 0.0
    %198 = vmatprep.subr.mxu0 0.0
    %199 = vmatpush1.msra.mxu0 0.0
    %200 = vmatprep.subr.mxu0 0.0
    %201 = vmatpush1.msra.mxu0 0.0
    %202 = vmatprep.subr.mxu0 0.0
    %203 = vmatpush1.msra.mxu0 0.0
    %204 = vmatprep.subr.mxu0 0.0
    %205 = vmatpush1.msra.mxu0 0.0
    %206 = vmatprep.subr.mxu0 0.0
    %207 = vmatpush1.msra.mxu0 0.0
    %208 = vmatprep.mubr.f32.mxu0 0.0
    %v209 = vand.u32 %v43, 4294901760
    %210 = vmatmul.mubr.f32.gmra.mrb[0].mxu0 %v209
    %v211 = vpop.f32.mrb[0].mxu0
    %v212 = vadd.f32 %v121, %v211
    %v213 = vpop.f32.mrb[0].mxu0
    %214 = vdwg.mxu0
    %215 = vmatprep.subr.mxu0 0.0
    %v216 = vand.u32 %v18, 4294901760
    %v217 = vsub.f32 %v18, %v216
    %218 = vmatpush1.msra.mxu0 %v217
    %219 = vmatprep.subr.mxu0 0.0
    %v220 = vand.u32 %v19, 4294901760
    %v221 = vsub.f32 %v19, %v220
    %222 = vmatpush1.msra.mxu0 %v221
    %223 = vmatprep.subr.mxu0 0.0
    %v224 = vand.u32 %v20, 4294901760
    %v225 = vsub.f32 %v20, %v224
    %226 = vmatpush1.msra.mxu0 %v225
    %227 = vmatprep.subr.mxu0 0.0
    %v228 = vand.u32 %v21, 4294901760
    %v229 = vsub.f32 %v21, %v228
    %230 = vmatpush1.msra.mxu0 %v229
    %231 = vmatprep.subr.mxu0 0.0
    %232 = vmatpush1.msra.mxu0 0.0
    %233 = vmatprep.subr.mxu0 0.0
    %234 = vmatpush1.msra.mxu0 0.0
    %235 = vmatprep.subr.mxu0 0.0
    %236 = vmatpush1.msra.mxu0 0.0
    %237 = vmatprep.subr.mxu0 0.0
    %238 = vmatpush1.msra.mxu0 0.0
    %239 = vmatprep.subr.mxu0 0.0
    %240 = vmatpush1.msra.mxu0 0.0
    %241 = vmatprep.subr.mxu0 0.0
    %242 = vmatpush1.msra.mxu0 0.0
    %243 = vmatprep.subr.mxu0 0.0
    %244 = vmatpush1.msra.mxu0 0.0
    %245 = vmatprep.subr.mxu0 0.0
    %246 = vmatpush1.msra.mxu0 0.0
    %247 = vmatprep.subr.mxu0 0.0
    %248 = vmatpush1.msra.mxu0 0.0
    %249 = vmatprep.subr.mxu0 0.0
    %250 = vmatpush1.msra.mxu0 0.0
    %251 = vmatprep.subr.mxu0 0.0
    %252 = vmatpush1.msra.mxu0 0.0
    %253 = vmatprep.subr.mxu0 0.0
    %254 = vmatpush1.msra.mxu0 0.0
    %255 = vmatprep.subr.mxu0 0.0
    %256 = vmatpush1.msra.mxu0 0.0
    %257 = vmatprep.subr.mxu0 0.0
    %258 = vmatpush1.msra.mxu0 0.0
    %259 = vmatprep.subr.mxu0 0.0
    %260 = vmatpush1.msra.mxu0 0.0
    %261 = vmatprep.subr.mxu0 0.0
    %262 = vmatpush1.msra.mxu0 0.0
    %263 = vmatprep.subr.mxu0 0.0
    %264 = vmatpush1.msra.mxu0 0.0
    %265 = vmatprep.subr.mxu0 0.0
    %266 = vmatpush1.msra.mxu0 0.0
    %267 = vmatprep.subr.mxu0 0.0
    %268 = vmatpush1.msra.mxu0 0.0
    %269 = vmatprep.subr.mxu0 0.0
    %270 = vmatpush1.msra.mxu0 0.0
    %271 = vmatprep.subr.mxu0 0.0
    %272 = vmatpush1.msra.mxu0 0.0
    %273 = vmatprep.subr.mxu0 0.0
    %274 = vmatpush1.msra.mxu0 0.0
    %275 = vmatprep.subr.mxu0 0.0
    %276 = vmatpush1.msra.mxu0 0.0
    %277 = vmatprep.subr.mxu0 0.0
    %278 = vmatpush1.msra.mxu0 0.0
    %279 = vmatprep.subr.mxu0 0.0
    %280 = vmatpush1.msra.mxu0 0.0
    %281 = vmatprep.subr.mxu0 0.0
    %282 = vmatpush1.msra.mxu0 0.0
    %283 = vmatprep.subr.mxu0 0.0
    %284 = vmatpush1.msra.mxu0 0.0
    %285 = vmatprep.subr.mxu0 0.0
    %286 = vmatpush1.msra.mxu0 0.0
    %287 = vmatprep.mubr.f32.mxu0 0.0
    %v288 = vand.u32 %v43, 4294901760
    %v289 = vsub.f32 %v43, %v288
    %290 = vmatmul.mubr.f32.gmra.mrb[0].mxu0 %v289
    %v291 = vpop.f32.mrb[0].mxu0
    %v292 = vadd.f32 %v212, %v291
    %v293 = vpop.f32.mrb[0].mxu0
    %294 = vdwg.mxu0
    %295 = vmatprep.subr.mxu0 0.0
    %v296 = vand.u32 %v18, 4294901760
    %297 = vmatpush1.msra.mxu0 %v296
    %298 = vmatprep.subr.mxu0 0.0
    %v299 = vand.u32 %v19, 4294901760
    %300 = vmatpush1.msra.mxu0 %v299
    %301 = vmatprep.subr.mxu0 0.0
    %v302 = vand.u32 %v20, 4294901760
    %303 = vmatpush1.msra.mxu0 %v302
    %304 = vmatprep.subr.mxu0 0.0
    %v305 = vand.u32 %v21, 4294901760
    %306 = vmatpush1.msra.mxu0 %v305
    %307 = vmatprep.subr.mxu0 0.0
    %308 = vmatpush1.msra.mxu0 0.0
    %309 = vmatprep.subr.mxu0 0.0
    %310 = vmatpush1.msra.mxu0 0.0
    %311 = vmatprep.subr.mxu0 0.0
    %312 = vmatpush1.msra.mxu0 0.0
    %313 = vmatprep.subr.mxu0 0.0
    %314 = vmatpush1.msra.mxu0 0.0
    %315 = vmatprep.subr.mxu0 0.0
    %316 = vmatpush1.msra.mxu0 0.0
    %317 = vmatprep.subr.mxu0 0.0
    %318 = vmatpush1.msra.mxu0 0.0
    %319 = vmatprep.subr.mxu0 0.0
    %320 = vmatpush1.msra.mxu0 0.0
    %321 = vmatprep.subr.mxu0 0.0
    %322 = vmatpush1.msra.mxu0 0.0
    %323 = vmatprep.subr.mxu0 0.0
    %324 = vmatpush1.msra.mxu0 0.0
    %325 = vmatprep.subr.mxu0 0.0
    %326 = vmatpush1.msra.mxu0 0.0
    %327 = vmatprep.subr.mxu0 0.0
    %328 = vmatpush1.msra.mxu0 0.0
    %329 = vmatprep.subr.mxu0 0.0
    %330 = vmatpush1.msra.mxu0 0.0
    %331 = vmatprep.subr.mxu0 0.0
    %332 = vmatpush1.msra.mxu0 0.0
    %333 = vmatprep.subr.mxu0 0.0
    %334 = vmatpush1.msra.mxu0 0.0
    %335 = vmatprep.subr.mxu0 0.0
    %336 = vmatpush1.msra.mxu0 0.0
    %337 = vmatprep.subr.mxu0 0.0
    %338 = vmatpush1.msra.mxu0 0.0
    %339 = vmatprep.subr.mxu0 0.0
    %340 = vmatpush1.msra.mxu0 0.0
    %341 = vmatprep.subr.mxu0 0.0
    %342 = vmatpush1.msra.mxu0 0.0
    %343 = vmatprep.subr.mxu0 0.0
    %344 = vmatpush1.msra.mxu0 0.0
    %345 = vmatprep.subr.mxu0 0.0
    %346 = vmatpush1.msra.mxu0 0.0
    %347 = vmatprep.subr.mxu0 0.0
    %348 = vmatpush1.msra.mxu0 0.0
    %349 = vmatprep.subr.mxu0 0.0
    %350 = vmatpush1.msra.mxu0 0.0
    %351 = vmatprep.subr.mxu0 0.0
    %352 = vmatpush1.msra.mxu0 0.0
    %353 = vmatprep.subr.mxu0 0.0
    %354 = vmatpush1.msra.mxu0 0.0
    %355 = vmatprep.subr.mxu0 0.0
    %356 = vmatpush1.msra.mxu0 0.0
    %357 = vmatprep.subr.mxu0 0.0
    %358 = vmatpush1.msra.mxu0 0.0
    %359 = vmatprep.subr.mxu0 0.0
    %360 = vmatpush1.msra.mxu0 0.0
    %361 = vmatprep.subr.mxu0 0.0
    %362 = vmatpush1.msra.mxu0 0.0
    %363 = vmatprep.mubr.f32.mxu0 0.0
    %v364 = vand.u32 %v43, 4294901760
    %v365 = vsub.f32 %v43, %v364
    %v366 = vand.u32 %v365, 4294901760
    %367 = vmatmul.mubr.f32.gmra.mrb[0].mxu0 %v366
    %v368 = vpop.f32.mrb[0].mxu0
    %v369 = vadd.f32 %v292, %v368
    %v370 = vpop.f32.mrb[0].mxu0
    %371 = vdwg.mxu0
    %372 = vmatprep.subr.mxu0 0.0
    %v373 = vand.u32 %v18, 4294901760
    %v374 = vsub.f32 %v18, %v373
    %v375 = vand.u32 %v374, 4294901760
    %376 = vmatpush1.msra.mxu0 %v375
    %377 = vmatprep.subr.mxu0 0.0
    %v378 = vand.u32 %v19, 4294901760
    %v379 = vsub.f32 %v19, %v378
    %v380 = vand.u32 %v379, 4294901760
    %381 = vmatpush1.msra.mxu0 %v380
    %382 = vmatprep.subr.mxu0 0.0
    %v383 = vand.u32 %v20, 4294901760
    %v384 = vsub.f32 %v20, %v383
    %v385 = vand.u32 %v384, 4294901760
    %386 = vmatpush1.msra.mxu0 %v385
    %387 = vmatprep.subr.mxu0 0.0
    %v388 = vand.u32 %v21, 4294901760
    %v389 = vsub.f32 %v21, %v388
    %v390 = vand.u32 %v389, 4294901760
    %391 = vmatpush1.msra.mxu0 %v390
    %392 = vmatprep.subr.mxu0 0.0
    %393 = vmatpush1.msra.mxu0 0.0
    %394 = vmatprep.subr.mxu0 0.0
    %395 = vmatpush1.msra.mxu0 0.0
    %396 = vmatprep.subr.mxu0 0.0
    %397 = vmatpush1.msra.mxu0 0.0
    %398 = vmatprep.subr.mxu0 0.0
    %399 = vmatpush1.msra.mxu0 0.0
    %400 = vmatprep.subr.mxu0 0.0
    %401 = vmatpush1.msra.mxu0 0.0
    %402 = vmatprep.subr.mxu0 0.0
    %403 = vmatpush1.msra.mxu0 0.0
    %404 = vmatprep.subr.mxu0 0.0
    %405 = vmatpush1.msra.mxu0 0.0
    %406 = vmatprep.subr.mxu0 0.0
    %407 = vmatpush1.msra.mxu0 0.0
    %408 = vmatprep.subr.mxu0 0.0
    %409 = vmatpush1.msra.mxu0 0.0
    %410 = vmatprep.subr.mxu0 0.0
    %411 = vmatpush1.msra.mxu0 0.0
    %412 = vmatprep.subr.mxu0 0.0
    %413 = vmatpush1.msra.mxu0 0.0
    %414 = vmatprep.subr.mxu0 0.0
    %415 = vmatpush1.msra.mxu0 0.0
    %416 = vmatprep.subr.mxu0 0.0
    %417 = vmatpush1.msra.mxu0 0.0
    %418 = vmatprep.subr.mxu0 0.0
    %419 = vmatpush1.msra.mxu0 0.0
    %420 = vmatprep.subr.mxu0 0.0
    %421 = vmatpush1.msra.mxu0 0.0
    %422 = vmatprep.subr.mxu0 0.0
    %423 = vmatpush1.msra.mxu0 0.0
    %424 = vmatprep.subr.mxu0 0.0
    %425 = vmatpush1.msra.mxu0 0.0
    %426 = vmatprep.subr.mxu0 0.0
    %427 = vmatpush1.msra.mxu0 0.0
    %428 = vmatprep.subr.mxu0 0.0
    %429 = vmatpush1.msra.mxu0 0.0
    %430 = vmatprep.subr.mxu0 0.0
    %431 = vmatpush1.msra.mxu0 0.0
    %432 = vmatprep.subr.mxu0 0.0
    %433 = vmatpush1.msra.mxu0 0.0
    %434 = vmatprep.subr.mxu0 0.0
    %435 = vmatpush1.msra.mxu0 0.0
    %436 = vmatprep.subr.mxu0 0.0
    %437 = vmatpush1.msra.mxu0 0.0
    %438 = vmatprep.subr.mxu0 0.0
    %439 = vmatpush1.msra.mxu0 0.0
    %440 = vmatprep.subr.mxu0 0.0
    %441 = vmatpush1.msra.mxu0 0.0
    %442 = vmatprep.subr.mxu0 0.0
    %443 = vmatpush1.msra.mxu0 0.0
    %444 = vmatprep.subr.mxu0 0.0
    %445 = vmatpush1.msra.mxu0 0.0
    %446 = vmatprep.subr.mxu0 0.0
    %447 = vmatpush1.msra.mxu0 0.0
    %448 = vmatprep.mubr.f32.mxu0 0.0
    %v449 = vand.u32 %v43, 4294901760
    %450 = vmatmul.mubr.f32.gmra.mrb[0].mxu0 %v449
    %v451 = vpop.f32.mrb[0].mxu0
    %v452 = vadd.f32 %v369, %v451
    %v453 = vpop.f32.mrb[0].mxu0
    %454 = vdwg.mxu0
    %455 = vmatprep.subr.mxu0 0.0
    %v456 = vand.u32 %v18, 4294901760
    %457 = vmatpush1.msra.mxu0 %v456
    %458 = vmatprep.subr.mxu0 0.0
    %v459 = vand.u32 %v19, 4294901760
    %460 = vmatpush1.msra.mxu0 %v459
    %461 = vmatprep.subr.mxu0 0.0
    %v462 = vand.u32 %v20, 4294901760
    %463 = vmatpush1.msra.mxu0 %v462
    %464 = vmatprep.subr.mxu0 0.0
    %v465 = vand.u32 %v21, 4294901760
    %466 = vmatpush1.msra.mxu0 %v465
    %467 = vmatprep.subr.mxu0 0.0
    %468 = vmatpush1.msra.mxu0 0.0
    %469 = vmatprep.subr.mxu0 0.0
    %470 = vmatpush1.msra.mxu0 0.0
    %471 = vmatprep.subr.mxu0 0.0
    %472 = vmatpush1.msra.mxu0 0.0
    %473 = vmatprep.subr.mxu0 0.0
    %474 = vmatpush1.msra.mxu0 0.0
    %475 = vmatprep.subr.mxu0 0.0
    %476 = vmatpush1.msra.mxu0 0.0
    %477 = vmatprep.subr.mxu0 0.0
    %478 = vmatpush1.msra.mxu0 0.0
    %479 = vmatprep.subr.mxu0 0.0
    %480 = vmatpush1.msra.mxu0 0.0
    %481 = vmatprep.subr.mxu0 0.0
    %482 = vmatpush1.msra.mxu0 0.0
    %483 = vmatprep.subr.mxu0 0.0
    %484 = vmatpush1.msra.mxu0 0.0
    %485 = vmatprep.subr.mxu0 0.0
    %486 = vmatpush1.msra.mxu0 0.0
    %487 = vmatprep.subr.mxu0 0.0
    %488 = vmatpush1.msra.mxu0 0.0
    %489 = vmatprep.subr.mxu0 0.0
    %490 = vmatpush1.msra.mxu0 0.0
    %491 = vmatprep.subr.mxu0 0.0
    %492 = vmatpush1.msra.mxu0 0.0
    %493 = vmatprep.subr.mxu0 0.0
    %494 = vmatpush1.msra.mxu0 0.0
    %495 = vmatprep.subr.mxu0 0.0
    %496 = vmatpush1.msra.mxu0 0.0
    %497 = vmatprep.subr.mxu0 0.0
    %498 = vmatpush1.msra.mxu0 0.0
    %499 = vmatprep.subr.mxu0 0.0
    %500 = vmatpush1.msra.mxu0 0.0
    %501 = vmatprep.subr.mxu0 0.0
    %502 = vmatpush1.msra.mxu0 0.0
    %503 = vmatprep.subr.mxu0 0.0
    %504 = vmatpush1.msra.mxu0 0.0
    %505 = vmatprep.subr.mxu0 0.0
    %506 = vmatpush1.msra.mxu0 0.0
    %507 = vmatprep.subr.mxu0 0.0
    %508 = vmatpush1.msra.mxu0 0.0
    %509 = vmatprep.subr.mxu0 0.0
    %510 = vmatpush1.msra.mxu0 0.0
    %511 = vmatprep.subr.mxu0 0.0
    %512 = vmatpush1.msra.mxu0 0.0
    %513 = vmatprep.subr.mxu0 0.0
    %514 = vmatpush1.msra.mxu0 0.0
    %515 = vmatprep.subr.mxu0 0.0
    %516 = vmatpush1.msra.mxu0 0.0
    %517 = vmatprep.subr.mxu0 0.0
    %518 = vmatpush1.msra.mxu0 0.0
    %519 = vmatprep.subr.mxu0 0.0
    %520 = vmatpush1.msra.mxu0 0.0
    %521 = vmatprep.subr.mxu0 0.0
    %522 = vmatpush1.msra.mxu0 0.0
    %523 = vmatprep.mubr.f32.mxu0 0.0
    %v524 = vand.u32 %v43, 4294901760
    %525 = vmatmul.mubr.f32.gmra.mrb[0].mxu0 %v524
    %v526 = vpop.f32.mrb[0].mxu0
    %v527 = vadd.f32 %v452, %v526
    %v528 = vpop.f32.mrb[0].mxu0
    %529 = vdwg.mxu0
    %v530 = vmul.f32 %v527, %v39
    %v531 = vmax.f32 %v530, -1.0
    %v532 = vmin.f32 %v531, 1.0
    %v533 = vmul.f32 %v532, %v532
    %v534 = vsub.f32 1.0, %v533
    %v535 = vmax.f32 %v534, 0.0
    %v536 = vrsqrt.pop %v535
    %v537 = vmul.f32 %v535, %v536
    %vm538 = vcmp.eq.f32.partialorder %v535, inf
    %v539 = vsel %vm538, %v535, %v537
    %vm540 = vcmp.eq.f32.partialorder %v535, 0.0
    %v541 = vand.u32 %v535, 2147483648
    %v542 = vsel %vm540, %v541, %v539
    %v543 = vmul.f32 %v532, 0.87758255
    %v544 = vmul.f32 %v542, 0.47942555
    %v545 = vsub.f32 %v543, %v544
    %v546 = vsub.f32 %v532, -0.87758255
    %vm547 = vcmp.le.f32.partialorder %v546, 0.0
    %v548 = vsub.f32 %v532, 0.23971277
    %v549 = vsel %vm547, %v548, %v545
    %v550 = vld [vmem:[%s2] sm:$0xff]
    %v551 = vstv %s15
    %v552 = vsub.s32 %v550, %v551
    %553 = vset.pattern.permute.xlu0 0
    %554 = vperm.xlu0 %553, %v552
    %v555 = vpop.permute.xlu0 %554
    %vm556 = vcmp.eq.s32.totalorder %v17, %v555
    %v557 = vsel %vm556, %v549, %v532
    %v558 = vmul.f32 %v557, 64.0
    %559 = vst [vmem:[#allocation2] sm:$0xff] %v558
    // Predicated region
    $region14: #{tpu_custom_call.1} parent=1 // pred_check
      _
    $region15: #{tpu_custom_call.1} parent=1 // pred_check_branch
      %561 = sbr.rel (0) target = $region17
    $region16: #{tpu_custom_call.1} parent=1 // pred_region
      %s563 = ssub.s32 128, 128
      %564 = vsyncadd [#allocation3], %s563
      %s566 = sshll.u32 [#allocation2], 4
      %s567 = int_to_ptr.vmem [resolvable:$true] %s566
      %569 = dma.vmem_to_hbm [thread:$0]  %s567, 128, %s3, [#allocation3]
    $region17: #{tpu_custom_call.1} parent=1 // pred_fallthru
      _
    // Predicated region
    $region18: #{tpu_custom_call.1} parent=1 // pred_check
      _
    $region19: #{tpu_custom_call.1} parent=1 // pred_check_branch
      %571 = sbr.rel (0) target = $region21
    $region20: #{tpu_custom_call.1} parent=1 // pred_region
      %572 = dma.done [#allocation3], 128
    $region21: #{tpu_custom_call.1} parent=1 // pred_fallthru
      _
    %573 = vsyncpa [#allocation3], 1

</llo_original>
